<compile_context>
chip_gen: v6e
topology: v6e:2x2x1
jax: 0.10.0
libtpu: 0.0.40
codegen_flags: <defaults>
</compile_context>

<pallas_src>
import jax
import jax.numpy as jnp
from jax import lax
from jax.experimental import pallas as pl
from jax.experimental.pallas import tpu as pltpu

_LANES = 128
_TILE_BYTES = 4 * 1024 * 1024   # ~4 MiB input tile; 8 MiB double-buffered.


def _make_stats_kernel(tile_rows, acc_sub, compute_dtype):
    """Streaming min/max over a lane-dense [tile_rows, 128] slab."""
    n_fold = tile_rows // acc_sub

    def kernel(x_ref, stats_ref, acc_min_ref, acc_max_ref):
        i = pl.program_id(0)

        @pl.when(i == 0)
        def _init():
            acc_min_ref[...] = jnp.full_like(acc_min_ref, jnp.inf)
            acc_max_ref[...] = jnp.full_like(acc_max_ref, -jnp.inf)

        xv = x_ref[...]
        if xv.dtype != compute_dtype:
            xv = xv.astype(compute_dtype)
        # Fold across vregs first (pure VPU, no XLU), then into the 1-vreg acc.
        x3 = xv.reshape(n_fold, acc_sub, _LANES)
        acc_min_ref[...] = jnp.minimum(acc_min_ref[...], jnp.min(x3, axis=0))
        acc_max_ref[...] = jnp.maximum(acc_max_ref[...], jnp.max(x3, axis=0))

        @pl.when(i == pl.num_programs(0) - 1)
        def _finalize():
            # Cross-lane reduce only once, on a single vreg, at the very end.
            vmin = jnp.min(acc_min_ref[...].astype(jnp.float32))
            vmax = jnp.max(acc_max_ref[...].astype(jnp.float32))
            sub = lax.broadcasted_iota(jnp.int32, (8, _LANES), 0)
            # Layout contract (read by the wrapper): sublane 0 carries the min
            # (all lanes), sublanes 1..7 carry the max.  One full, unmasked
            # (8,128) vreg store.
            stats_ref[...] = jnp.where(sub == 0, vmin, vmax)

    return kernel


def qplotter_forward(x):
    """Pallas implementation of QPlotter.forward_fp.

    Args:
      x: float array (e.g. NCHW activations).
    Returns:
      (y, (vmin, vmax)): y is x (identity, no copy); vmin/vmax are float32
      scalars mirroring the stats computed inside QPlotter._log.
    """
    total = x.size
    if total == 0:
        # TODO(synk): torch errors on min/max of an empty tensor; return the
        # reduction identity elements instead.
        return x, (jnp.float32(jnp.inf), jnp.float32(-jnp.inf))

    flat = x.reshape(-1)

    # Dtype-aware sublane tiling (8 rows for 4-byte, 16 for 2-byte, 32 for
    # 1-byte elements).  Accumulate in the input dtype for f32/bf16; upcast
    # other dtypes to f32.  (On v5e bf16 VALU is absent; Mosaic handles the
    # widening there, and the common f32 path emits no cast at all.)
    if x.dtype == jnp.bfloat16:
        compute_dtype, acc_sub = jnp.bfloat16, 16
    else:
        compute_dtype, acc_sub = jnp.float32, 8
    itemsize = x.dtype.itemsize
    sub_in = max(8, 32 // itemsize)
    sub_req = max(sub_in, acc_sub)

    rows = total // _LANES
    use_kernel = (total % _LANES == 0) and rows >= sub_req

    if not use_kernel:
        # Tiny or lane-misaligned inputs: a fused plain-JAX reduce.  This
        # avoids any full-array padding/slicing copy.
        vmin = jnp.min(flat).astype(jnp.float32)
        vmax = jnp.max(flat).astype(jnp.float32)
        return x, (vmin, vmax)

    max_tile_rows = max(sub_req,
                        (_TILE_BYTES // (_LANES * itemsize)) // sub_req * sub_req)
    rows_aligned = (rows // sub_req) * sub_req
    tile_rows = min(max_tile_rows, rows_aligned)
    num_tiles = rows_aligned // tile_rows
    rows_main = num_tiles * tile_rows

    # Free bitcast: total % 128 == 0, so no pad / no copy.
    x2d = flat.reshape(rows, _LANES)

    kernel = _make_stats_kernel(tile_rows, acc_sub, compute_dtype)

    main_bytes = rows_main * _LANES * itemsize
    stats = pl.pallas_call(
        kernel,
        out_shape=jax.ShapeDtypeStruct((8, _LANES), jnp.float32),
        grid=(num_tiles,),
        in_specs=[pl.BlockSpec((tile_rows, _LANES), lambda i: (i, 0))],
        out_specs=pl.BlockSpec((8, _LANES), lambda i: (0, 0)),
        scratch_shapes=[
            pltpu.VMEM((acc_sub, _LANES), compute_dtype),
            pltpu.VMEM((acc_sub, _LANES), compute_dtype),
        ],
        compiler_params=pltpu.CompilerParams(
            dimension_semantics=("arbitrary",)),
        cost_estimate=pl.CostEstimate(
            flops=2 * rows_main * _LANES,
            transcendentals=0,
            bytes_accessed=main_bytes + 8 * _LANES * 4),
    )(x2d)

    vmin = stats[0, 0]
    vmax = stats[1, 0]

    # Row tail not covered by the tiled kernel (< one tile): fused plain-JAX
    # reduce on the small remainder; no full-array copy.
    n_main = rows_main * _LANES
    if n_main < total:
        tail = flat[n_main:]
        vmin = jnp.minimum(vmin, jnp.min(tail).astype(jnp.float32))
        vmax = jnp.maximum(vmax, jnp.max(tail).astype(jnp.float32))

    # Identity pass-through (PlotHackFn.forward is identity): return x
    # directly, no redundant HBM writeback.
    return x, (vmin, vmax)


if __name__ == "__main__":
    key = jax.random.PRNGKey(0)

    # Small NCHW input consistent with a conv-style activation the plotter
    # sees: batch=2, channels=4, spatial=16.
    x = jax.random.normal(key, (2, 4, 16, 16), dtype=jnp.float32)
    y, (vmin, vmax) = qplotter_forward(x)
    jax.block_until_ready((y, vmin, vmax))

    # Forward must be an exact identity on x.
    assert y.shape == x.shape and y.dtype == x.dtype
    assert bool(jnp.all(y == x))
    # Stats must match plain-JAX reductions.
    assert bool(jnp.isclose(vmin, jnp.min(x)))
    assert bool(jnp.isclose(vmax, jnp.max(x)))

    # Secondary check: row tail (rows not a multiple of the tile rows).
    x2 = jax.random.normal(jax.random.PRNGKey(1), (1, 3, 4, 128),
                           dtype=jnp.float32)   # 1536 elems -> 12 rows of 128
    y2, (vmin2, vmax2) = qplotter_forward(x2)
    jax.block_until_ready((y2, vmin2, vmax2))
    assert bool(jnp.all(y2 == x2))
    assert bool(jnp.isclose(vmin2, jnp.min(x2)))
    assert bool(jnp.isclose(vmax2, jnp.max(x2)))

    # Secondary check: lane-misaligned input (plain-JAX fallback path).
    x3 = jax.random.normal(jax.random.PRNGKey(2), (1, 3, 8, 40),
                           dtype=jnp.float32)   # 960 elems, not % 128
    y3, (vmin3, vmax3) = qplotter_forward(x3)
    jax.block_until_ready((y3, vmin3, vmax3))
    assert bool(jnp.all(y3 == x3))
    assert bool(jnp.isclose(vmin3, jnp.min(x3)))
    assert bool(jnp.isclose(vmax3, jnp.max(x3)))

    print("KERNEL_OK")
</pallas_src>

<mosaic_0001>
module attributes {stable_mosaic.version = 11 : i64} {
  func.func @kernel(%arg0: i32, %arg1: memref<16x128xf32, #tpu.memory_space<vmem>>, %arg2: memref<8x128xf32, #tpu.memory_space<vmem>>, %arg3: memref<8x128xf32, #tpu.memory_space<vmem>>, %arg4: memref<8x128xf32, #tpu.memory_space<vmem>>) attributes {dimension_semantics = [#tpu.dimension_semantics<arbitrary>], iteration_bounds = array<i64: 1>, scalar_prefetch = 0 : i64, scratch_operands = 2 : i64, tpu.core_type = #tpu.core_type<tc>, window_params = [{transform_indices = @transform_0, window_bounds = array<i64: 16, 128>}, {pipeline_mode = #tpu.pipeline_mode<synchronous>, transform_indices = @transform_1, window_bounds = array<i64: 8, 128>}]} {
    %c0_i32 = arith.constant 0 : i32
    %0 = arith.cmpi eq, %arg0, %c0_i32 : i32
    %1 = arith.extui %0 : i1 to i32
    %c0_i32_0 = arith.constant 0 : i32
    %2 = arith.cmpi ne, %1, %c0_i32_0 : i32
    scf.if %2 {
      %cst_13 = arith.constant 0x7F800000 : f32
      %16 = vector.broadcast %cst_13 : f32 to vector<8x128xf32>
      %c0_14 = arith.constant 0 : index
      %c0_15 = arith.constant 0 : index
      %17 = vector.load %arg3[%c0_14, %c0_15] : memref<8x128xf32, #tpu.memory_space<vmem>>, vector<8x128xf32>
      tpu.vector_store %arg3[%c0_14, %c0_15], %16 {strides = array<i32>} : memref<8x128xf32, #tpu.memory_space<vmem>>, vector<8x128xf32>,
      %cst_16 = arith.constant 0xFF800000 : f32
      %18 = vector.broadcast %cst_16 : f32 to vector<8x128xf32>
      %c0_17 = arith.constant 0 : index
      %c0_18 = arith.constant 0 : index
      %19 = vector.load %arg4[%c0_17, %c0_18] : memref<8x128xf32, #tpu.memory_space<vmem>>, vector<8x128xf32>
      tpu.vector_store %arg4[%c0_17, %c0_18], %18 {strides = array<i32>} : memref<8x128xf32, #tpu.memory_space<vmem>>, vector<8x128xf32>,
    } else {
    }
    %c0 = arith.constant 0 : index
    %c0_1 = arith.constant 0 : index
    %3 = vector.load %arg1[%c0, %c0_1] : memref<16x128xf32, #tpu.memory_space<vmem>>, vector<16x128xf32>
    %4 = vector.shape_cast %3 : vector<16x128xf32> to vector<2x8x128xf32>
    %c0_2 = arith.constant 0 : index
    %c0_3 = arith.constant 0 : index
    %5 = vector.load %arg3[%c0_2, %c0_3] : memref<8x128xf32, #tpu.memory_space<vmem>>, vector<8x128xf32>
    %cst = arith.constant dense<0x7F800000> : vector<8x128xf32>
    %6 = vector.multi_reduction <minimumf>, %4, %cst [0] : vector<2x8x128xf32> to vector<8x128xf32>
    %7 = arith.minimumf %5, %6 : vector<8x128xf32>
    %c0_4 = arith.constant 0 : index
    %c0_5 = arith.constant 0 : index
    %8 = vector.load %arg3[%c0_4, %c0_5] : memref<8x128xf32, #tpu.memory_space<vmem>>, vector<8x128xf32>
    tpu.vector_store %arg3[%c0_4, %c0_5], %7 {strides = array<i32>} : memref<8x128xf32, #tpu.memory_space<vmem>>, vector<8x128xf32>,
    %c0_6 = arith.constant 0 : index
    %c0_7 = arith.constant 0 : index
    %9 = vector.load %arg4[%c0_6, %c0_7] : memref<8x128xf32, #tpu.memory_space<vmem>>, vector<8x128xf32>
    %cst_8 = arith.constant dense<0xFF800000> : vector<8x128xf32>
    %10 = vector.multi_reduction <maximumf>, %4, %cst_8 [0] : vector<2x8x128xf32> to vector<8x128xf32>
    %11 = arith.maximumf %9, %10 : vector<8x128xf32>
    %c0_9 = arith.constant 0 : index
    %c0_10 = arith.constant 0 : index
    %12 = vector.load %arg4[%c0_9, %c0_10] : memref<8x128xf32, #tpu.memory_space<vmem>>, vector<8x128xf32>
    tpu.vector_store %arg4[%c0_9, %c0_10], %11 {strides = array<i32>} : memref<8x128xf32, #tpu.memory_space<vmem>>, vector<8x128xf32>,
    %c0_i32_11 = arith.constant 0 : i32
    %13 = arith.cmpi eq, %arg0, %c0_i32_11 : i32
    %14 = arith.extui %13 : i1 to i32
    %c0_i32_12 = arith.constant 0 : i32
    %15 = arith.cmpi ne, %14, %c0_i32_12 : i32
    scf.if %15 {
      %c0_13 = arith.constant 0 : index
      %c0_14 = arith.constant 0 : index
      %16 = vector.load %arg3[%c0_13, %c0_14] : memref<8x128xf32, #tpu.memory_space<vmem>>, vector<8x128xf32>
      %17 = vector.shape_cast %16 : vector<8x128xf32> to vector<1x8x128xf32>
      %cst_15 = arith.constant dense<0x7F800000> : vector<1xf32>
      %18 = vector.multi_reduction <minimumf>, %17, %cst_15 [1, 2] : vector<1x8x128xf32> to vector<1xf32>
      %19 = vector.shape_cast %18 : vector<1xf32> to vector<1x1x1xf32>
      %20 = vector.extract %19[0, 0, 0] : f32 from vector<1x1x1xf32>
      %c0_16 = arith.constant 0 : index
      %c0_17 = arith.constant 0 : index
      %21 = vector.load %arg4[%c0_16, %c0_17] : memref<8x128xf32, #tpu.memory_space<vmem>>, vector<8x128xf32>
      %22 = vector.shape_cast %21 : vector<8x128xf32> to vector<1x8x128xf32>
      %cst_18 = arith.constant dense<0xFF800000> : vector<1xf32>
      %23 = vector.multi_reduction <maximumf>, %22, %cst_18 [1, 2] : vector<1x8x128xf32> to vector<1xf32>
      %24 = vector.shape_cast %23 : vector<1xf32> to vector<1x1x1xf32>
      %25 = vector.extract %24[0, 0, 0] : f32 from vector<1x1x1xf32>
      %26 = tpu.iota {dimensions = array<i32: 0>} : vector<8x128xi32>
      %c0_i32_19 = arith.constant 0 : i32
      %27 = vector.broadcast %c0_i32_19 : i32 to vector<8x128xi32>
      %28 = arith.cmpi eq, %26, %27 : vector<8x128xi32>
      %29 = vector.broadcast %20 : f32 to vector<8x128xf32>
      %30 = vector.broadcast %25 : f32 to vector<8x128xf32>
      %31 = arith.select %28, %29, %30 : vector<8x128xi1>, vector<8x128xf32>
      %c0_20 = arith.constant 0 : index
      %c0_21 = arith.constant 0 : index
      %32 = vector.load %arg2[%c0_20, %c0_21] : memref<8x128xf32, #tpu.memory_space<vmem>>, vector<8x128xf32>
      tpu.vector_store %arg2[%c0_20, %c0_21], %31 {strides = array<i32>} : memref<8x128xf32, #tpu.memory_space<vmem>>, vector<8x128xf32>,
    } else {
    }
    return
  }
  func.func @transform_0(%arg0: i32) -> (i32, i32) {
    %c0_i32 = arith.constant 0 : i32
    %c0_i32_0 = arith.constant 0 : i32
    return %arg0, %c0_i32 : i32, i32
  }
  func.func @transform_1(%arg0: i32) -> (i32, i32) {
    %c0_i32 = arith.constant 0 : i32
    %c0_i32_0 = arith.constant 0 : i32
    %c0_i32_1 = arith.constant 0 : i32
    return %c0_i32, %c0_i32_0 : i32, i32
  }
}

</mosaic_0001>

<llo_original>
// kernel: tpu_custom_call.1
$region0: #{tpu_custom_call.1}
  #allocation0 [shape = 'u32[]', space=smem, size = 0x4, offset = 0x4, fixed_abs, tag = 'smem constant byte address 0x4 - core index']
  #allocation1 [shape = 'u32[144,128]{1,0:T(1,128)}', space=vmem, size = 0x12000, scoped, tag = 'internal scratch']
  #allocation2 [shape = 'f32[8,128]{1,0:T(8,128)}', space=vmem, size = 0x1000, scoped, tag = 'scratch operand']
  #allocation3 [shape = 'f32[8,128]{1,0:T(8,128)}', space=vmem, size = 0x1000, scoped, tag = 'scratch operand']
  %s0 = inlined_call_operand.hbm [shape: f32[16,128], index: 0, kind: input, shape index: {}]
  %s1 = inlined_call_operand.hbm [shape: f32[8,128], index: 1, kind: output, shape index: {}]
  %s2 = sld [smem:[#allocation0]]
  $region26: #{tpu_custom_call.1} parent=0
    _
  %s4 = ssub.s32 1, %s2
  %s5 = scalar_select 0, %s4, %s2
  $region1: #{tpu_custom_call.1} parent=0
    #allocation4 [shape = 'u8[8192]{0}', space=vmem, size = 0x2000, scoped, tag = 'input window, operand 0, single buffered']
    #allocation5 [shape = 's32[1]{0}', space=sflag, size = 0x4, scoped, tag = 'scoped memory for tpu_custom_call.1']
    #allocation6 [shape = 's32[1]{0}', space=sflag, size = 0x4, scoped, tag = 'scoped memory for tpu_custom_call.1']
    #allocation7 [shape = 'u8[4096]{0}', space=vmem, size = 0x1000, scoped, tag = 'output window, operand 0, single buffered']
    %6 = vsyncpa [#allocation5], 0
    %7 = vsyncpa [#allocation6], 0
    // Predicated region
    $region2: #{tpu_custom_call.1} parent=1 // pred_check
      _
    $region3: #{tpu_custom_call.1} parent=1 // pred_check_branch
      %9 = sbr.rel (0) target = $region5
    $region4: #{tpu_custom_call.1} parent=1 // pred_region
      %s11 = ssub.s32 256, 256
      %12 = vsyncadd [#allocation5], %s11
      %s13 = sshll.u32 [#allocation4], 4
      %s14 = int_to_ptr.vmem [resolvable:$true] %s13
      %19 = dma.hbm_to_vmem [thread:$0]  %s0, 256, %s14, [#allocation5], 128, 128, 8
    $region5: #{tpu_custom_call.1} parent=1 // pred_fallthru
      _
    // Predicated region
    $region6: #{tpu_custom_call.1} parent=1 // pred_check
      _
    $region7: #{tpu_custom_call.1} parent=1 // pred_check_branch
      %21 = sbr.rel (0) target = $region9
    $region8: #{tpu_custom_call.1} parent=1 // pred_region
      %22 = dma.done [#allocation5], 256
    $region9: #{tpu_custom_call.1} parent=1 // pred_fallthru
      _
    %p23 = scmp.eq.s32.totalorder 0, 0
    // Predicated region
    $region10: #{tpu_custom_call.1} parent=1 // pred_check
      %p24 = pneg %p23
    $region11: #{tpu_custom_call.1} parent=1 // pred_check_branch
      %26 = sbr.rel (%p24) target = $region13
    $region12: #{tpu_custom_call.1} parent=1 // pred_region
      %27 = vst [vmem:[#allocation2] sm:$0xff] inf
      %28 = vst [vmem:[#allocation3] sm:$0xff] -inf
    $region13: #{tpu_custom_call.1} parent=1 // pred_fallthru
      _
    %v29 = vld [vmem:[#allocation4] sm:$0xff]
    %v30 = vld [vmem:[#allocation4 + $0x8] sm:$0xff]
    %v31 = vld [vmem:[#allocation2] sm:$0xff]
    %v32 = vmin.f32 %v29, %v30
    %v33 = vmin.f32 %v31, %v32
    %34 = vst [vmem:[#allocation2] sm:$0xff] %v33
    %v35 = vld [vmem:[#allocation3] sm:$0xff]
    %v36 = vmax.f32 %v29, %v30
    %v37 = vmax.f32 %v35, %v36
    %38 = vst [vmem:[#allocation3] sm:$0xff] %v37
    // Predicated region
    $region14: #{tpu_custom_call.1} parent=1 // pred_check
      %p39 = pneg %p23
    $region15: #{tpu_custom_call.1} parent=1 // pred_check_branch
      %41 = sbr.rel (%p39) target = $region17
    $region16: #{tpu_custom_call.1} parent=1 // pred_region
      %v42 = vld [vmem:[#allocation2] sm:$0xff]
      %43 = vmin.xlane.f32.xlu0 %v42
      %v44 = vpop.xlane.xlu0 %43
      %v45 = vrot.slane %v44, 4
      %v46 = vmin.f32 %v44, %v45
      %v47 = vrot.slane %v46, 2
      %v48 = vmin.f32 %v46, %v47
      %v49 = vrot.slane %v48, 1
      %v50 = vmin.f32 %v48, %v49
      %s51 = vtos %v50
      %v52 = vld [vmem:[#allocation3] sm:$0xff]
      %53 = vmax.xlane.f32.xlu0 %v52
      %v54 = vpop.xlane.xlu0 %53
      %v55 = vrot.slane %v54, 4
      %v56 = vmax.f32 %v54, %v55
      %v57 = vrot.slane %v56, 2
      %v58 = vmax.f32 %v56, %v57
      %v59 = vrot.slane %v58, 1
      %v60 = vmax.f32 %v58, %v59
      %s61 = vtos %v60
      %v62 = vlaneseq
      %v63 = vshrl.u32 %v62, 7
      %vm64 = vcmp.eq.s32.totalorder %v63, 0
      %v65 = vstv %s51
      %v66 = vstv %s61
      %v67 = vsel %vm64, %v65, %v66
      %68 = vst [vmem:[#allocation7] sm:$0xff] %v67
    $region17: #{tpu_custom_call.1} parent=1 // pred_fallthru
      _
    // Predicated region
    $region18: #{tpu_custom_call.1} parent=1 // pred_check
      _
    $region19: #{tpu_custom_call.1} parent=1 // pred_check_branch
      %70 = sbr.rel (0) target = $region21
    $region20: #{tpu_custom_call.1} parent=1 // pred_region
      %s72 = ssub.s32 128, 128
      %73 = vsyncadd [#allocation6], %s72
      %s75 = sshll.u32 [#allocation7], 4
      %s76 = int_to_ptr.vmem [resolvable:$true] %s75
      %78 = dma.vmem_to_hbm [thread:$0]  %s76, 128, %s1, [#allocation6]
    $region21: #{tpu_custom_call.1} parent=1 // pred_fallthru
      _
    // Predicated region
    $region22: #{tpu_custom_call.1} parent=1 // pred_check
      _
    $region23: #{tpu_custom_call.1} parent=1 // pred_check_branch
      %80 = sbr.rel (0) target = $region25
    $region24: #{tpu_custom_call.1} parent=1 // pred_region
      %81 = dma.done [#allocation6], 128
    $region25: #{tpu_custom_call.1} parent=1 // pred_fallthru
      _
    %82 = vsyncpa [#allocation5], 1
    %83 = vsyncpa [#allocation6], 1

</llo_original>
